<compile_context>
chip_gen: v7x
topology: tpu7x:2x2x1
jax: 0.10.0
libtpu: 0.0.40
codegen_flags: <defaults>
</compile_context>

<pallas_src>
import functools

import jax
import jax.numpy as jnp
from jax.experimental import pallas as pl
from jax.experimental.pallas import tpu as pltpu

LANES = 128
SUBLANES = 8
# Per-input, per-pipeline-buffer block budget (bytes). With double buffering of
# both inputs the pipeline uses ~4x this, i.e. ~16 MiB at the default.
DEFAULT_BLOCK_BYTES = 4 * 1024 * 1024
DEFAULT_CHUNK_ROWS = 512                 # in-kernel accumulation chunk (256 KiB f32)
DEFAULT_MIN_PALLAS_ELEMENTS = 1 << 17    # below this, plain XLA is already fine


def _round_up(x, m):
    return ((x + m - 1) // m) * m


def _round_down(x, m):
    return (x // m) * m


def _detect_num_tensorcores():
    """Best-effort TensorCore-per-chip count (2 on v7x). Falls back to 1."""
    try:
        info = pltpu.get_tpu_info()
    except Exception:
        info = None
    if info is not None:
        for name in ("num_cores", "core_count", "num_tensorcores",
                     "tensor_core_count", "num_tensor_cores", "cores_per_chip"):
            v = getattr(info, name, None)
            if isinstance(v, int) and v >= 1:
                return v
    try:
        dev = jax.devices()[0]
        for name in ("num_cores", "core_count"):
            v = getattr(dev, name, None)
            if isinstance(v, int) and v >= 1:
                return v
    except Exception:
        pass
    return 1


def _dice_from_sums(intersection, total, smooth):
    dice = (2.0 * intersection + smooth) / (total + smooth)
    return 1.0 - dice


def _dice_partial_kernel(x_ref, y_ref, out_ref, *, rows, block_rows,
                         chunk_rows, inner_steps, needs_mask):
    c = pl.program_id(0)   # split index (one per TensorCore when core-parallel)
    i = pl.program_id(1)   # row-block index within the split

    @pl.when(i == 0)
    def _():
        out_ref[...] = jnp.zeros_like(out_ref)

    num_chunks = block_rows // chunk_rows
    groups = chunk_rows // SUBLANES

    def chunk_partials(xc, yc):
        # Fold a (chunk_rows, 128) f32 chunk down to two (8, 128) partials:
        # pure vreg-wise VPU adds, no cross-lane work.
        xg = xc.reshape(groups, SUBLANES, LANES)
        yg = yc.reshape(groups, SUBLANES, LANES)
        return jnp.sum(xg * yg, axis=0), jnp.sum(xg + yg, axis=0)

    def accumulate(row0):
        # row0 is None for fully-valid blocks (mask-free path), otherwise the
        # first *unclamped* row index of this block for tail/duplicate masking.
        if row0 is not None:
            # Hoisted out of the chunk loop (JAX does not CSE broadcasts).
            base_rid = row0 + jax.lax.broadcasted_iota(
                jnp.int32, (chunk_rows, LANES), 0)

        def one_chunk(j, carry):
            acc_xy, acc_s = carry
            if num_chunks == 1:
                start = 0
                xc = x_ref[...]
                yc = y_ref[...]
            else:
                start = pl.multiple_of(j * chunk_rows, chunk_rows)
                xc = x_ref[pl.ds(start, chunk_rows), :]
                yc = y_ref[pl.ds(start, chunk_rows), :]
            xc = xc.astype(jnp.float32)
            yc = yc.astype(jnp.float32)
            if row0 is not None:
                valid = (base_rid + start) < rows
                xc = jnp.where(valid, xc, 0.0)
                yc = jnp.where(valid, yc, 0.0)
            pxy, ps = chunk_partials(xc, yc)
            return acc_xy + pxy, acc_s + ps

        zero = jnp.zeros((SUBLANES, LANES), jnp.float32)
        if num_chunks == 1:
            acc_xy, acc_s = one_chunk(0, (zero, zero))
        else:
            unroll = 4 if num_chunks % 4 == 0 else (2 if num_chunks % 2 == 0 else 1)
            acc_xy, acc_s = jax.lax.fori_loop(
                0, num_chunks, one_chunk, (zero, zero), unroll=unroll)

        # out_ref block is (1, 2, 8, 128): slot 0 = sum(x*y), slot 1 = sum(x)+sum(y)
        out_ref[0, 0] += acc_xy
        out_ref[0, 1] += acc_s

    if needs_mask:
        b_raw = c * inner_steps + i              # unclamped block id
        row0 = b_raw * block_rows
        is_full = (row0 + block_rows) <= rows    # fully-valid (and non-duplicate)

        @pl.when(is_full)
        def _():
            accumulate(None)

        @pl.when(jnp.logical_not(is_full))
        def _():
            # Also zeroes clamped duplicate blocks (row0 >= rows -> all masked).
            accumulate(row0)
    else:
        accumulate(None)


def dice_loss(inputs, targets, smooth=1.0, *,
              target_block_bytes=DEFAULT_BLOCK_BYTES,
              chunk_rows=DEFAULT_CHUNK_ROWS,
              num_splits=None,
              min_pallas_elements=DEFAULT_MIN_PALLAS_ELEMENTS):
    """Pallas implementation of DiceLoss.forward (returns scalar f32)."""
    x = jnp.ravel(inputs)
    y = jnp.ravel(targets)
    n = x.shape[0]

    # Small-input fast path: kernel launch + pipeline warm-up dominates below
    # ~128K elements, and plain XLA is already HBM-bound there.
    if n < max(min_pallas_elements, SUBLANES * LANES):
        xf = x.astype(jnp.float32)
        yf = y.astype(jnp.float32)
        return _dice_from_sums(jnp.sum(xf * yf), jnp.sum(xf) + jnp.sum(yf), smooth)

    # View the flat data as (rows, 128). The reshape is free whenever
    # n % 128 == 0 (no 1024-alignment / full-array pad needed anymore); the
    # ragged last block is masked in-kernel.
    rem = n % LANES
    if rem:
        # TODO(synk): this pad copies both inputs once for n % 128 != 0 sizes.
        pad = LANES - rem
        x = jnp.pad(x, (0, pad))
        y = jnp.pad(y, (0, pad))
    rows = x.shape[0] // LANES
    x2 = x.reshape(rows, LANES)
    y2 = y.reshape(rows, LANES)

    # Block / chunk geometry. Blocks scale with itemsize so bf16 callers get
    # the same DMA granularity (bytes) as f32 callers; the in-kernel chunk loop
    # keeps temps at chunk size so big blocks fit VMEM on every generation.
    chunk_rows = max(SUBLANES, _round_down(int(chunk_rows), SUBLANES))
    chunk_rows = min(chunk_rows, max(SUBLANES, _round_down(rows, SUBLANES)))
    max_itemsize = max(x2.dtype.itemsize, y2.dtype.itemsize)
    target_rows = max(chunk_rows,
                      _round_down(int(target_block_bytes) // (LANES * max_itemsize),
                                  chunk_rows))
    block_rows = int(min(target_rows,
                         max(chunk_rows, _round_down(rows, chunk_rows))))
    total_blocks = pl.cdiv(rows, block_rows)

    # Split across TensorCores on multi-core chips (v7x); single loop elsewhere.
    if num_splits is None:
        cores = _detect_num_tensorcores()
        if cores > 1 and total_blocks >= cores:
            num_splits = cores
            split_sem = pltpu.CORE_PARALLEL   # genuinely shard rows across TCs
        else:
            num_splits = 1
            split_sem = pltpu.ARBITRARY
    else:
        num_splits = max(1, min(int(num_splits), total_blocks))
        split_sem = pltpu.PARALLEL if num_splits > 1 else pltpu.ARBITRARY

    inner_steps = pl.cdiv(total_blocks, num_splits)
    has_ragged = (rows % block_rows) != 0
    has_dup = (num_splits * inner_steps) != total_blocks
    needs_mask = has_ragged or has_dup

    def block_index(c, i):
        b = c * inner_steps + i
        # Clamp so split tails never index past the last block; the in-kernel
        # mask zeroes duplicated blocks so they contribute nothing.
        return (jnp.minimum(b, total_blocks - 1), 0)

    kernel = functools.partial(
        _dice_partial_kernel, rows=rows, block_rows=block_rows,
        chunk_rows=chunk_rows, inner_steps=inner_steps, needs_mask=needs_mask)

    # VMEM budget: 2 inputs x 2 pipeline buffers x block + chunk-sized temps.
    pipeline_bytes = 2 * block_rows * LANES * (x2.dtype.itemsize + y2.dtype.itemsize)
    temp_bytes = 8 * chunk_rows * LANES * 4
    vmem_limit = int(min(40 * 1024 * 1024,
                         max(16 * 1024 * 1024,
                             pipeline_bytes + temp_bytes + (2 << 20))))

    bytes_accessed = int(x2.size * x2.dtype.itemsize
                         + y2.size * y2.dtype.itemsize
                         + num_splits * 2 * SUBLANES * LANES * 4)
    cost = pl.CostEstimate(flops=int(4 * rows * LANES), transcendentals=0,
                           bytes_accessed=bytes_accessed)

    partials = pl.pallas_call(
        kernel,
        out_shape=jax.ShapeDtypeStruct(
            (num_splits, 2, SUBLANES, LANES), jnp.float32),
        grid_spec=pltpu.PrefetchScalarGridSpec(
            num_scalar_prefetch=0,
            grid=(num_splits, inner_steps),
            in_specs=[
                pl.BlockSpec((block_rows, LANES), block_index),
                pl.BlockSpec((block_rows, LANES), block_index),
            ],
            out_specs=pl.BlockSpec((1, 2, SUBLANES, LANES),
                                   lambda c, i: (c, 0, 0, 0)),
        ),
        compiler_params=pltpu.CompilerParams(
            dimension_semantics=(split_sem, pltpu.ARBITRARY),
            vmem_limit_bytes=vmem_limit,
        ),
        cost_estimate=cost,
    )(x2, y2)

    # Tiny O(1) epilogue: cross-lane reduce of the partials + dice formula.
    intersection = jnp.sum(partials[:, 0])
    sum_x_plus_y = jnp.sum(partials[:, 1])
    return _dice_from_sums(intersection, sum_x_plus_y, smooth)


def dice_loss_ref(inputs, targets, smooth=1.0):
    x = jnp.ravel(inputs).astype(jnp.float32)
    y = jnp.ravel(targets).astype(jnp.float32)
    intersection = jnp.sum(x * y)
    dice = (2.0 * intersection + smooth) / (jnp.sum(x) + jnp.sum(y) + smooth)
    return 1.0 - dice


if __name__ == "__main__":
    key = jax.random.PRNGKey(0)
    k1, k2, k3, k4, k5, k6 = jax.random.split(key, 6)

    # Case 1: small segmentation-like shapes (N=2, C=4, H=W=16); force the
    # kernel path (single unmasked block, inline chunk).
    inputs = jax.nn.sigmoid(jax.random.normal(k1, (2, 4, 16, 16), jnp.float32))
    targets = (jax.random.uniform(k2, (2, 4, 16, 16)) > 0.5).astype(jnp.float32)
    loss = dice_loss(inputs, targets, smooth=1.0, min_pallas_elements=0)
    loss = jax.block_until_ready(loss)
    ref = dice_loss_ref(inputs, targets, smooth=1.0)
    assert jnp.allclose(loss, ref, rtol=1e-5, atol=1e-5), (loss, ref)

    # Case 2: multi-block + ragged tail + explicit 2-way split (exercises the
    # masked pl.when path, clamped duplicate blocks, and the chunked fori_loop)
    # with small blocks forced so it stays fast at a small shape.
    inputs2 = jax.nn.sigmoid(jax.random.normal(k3, (2, 3, 64, 96), jnp.float32))
    targets2 = (jax.random.uniform(k4, (2, 3, 64, 96)) > 0.5).astype(jnp.float32)
    loss2 = dice_loss(inputs2, targets2, smooth=1.0, min_pallas_elements=0,
                      target_block_bytes=128 * LANES * 4, chunk_rows=64,
                      num_splits=2)
    loss2 = jax.block_until_ready(loss2)
    ref2 = dice_loss_ref(inputs2, targets2, smooth=1.0)
    assert jnp.allclose(loss2, ref2, rtol=1e-5, atol=1e-5), (loss2, ref2)

    # Case 3: bf16 passthrough with default thresholds/blocks (exercises the
    # in-kernel cast + multi-chunk fori_loop on the default path).
    inputs3 = jax.nn.sigmoid(
        jax.random.normal(k5, (2, 4, 128, 128), jnp.bfloat16))
    targets3 = (jax.random.uniform(k6, (2, 4, 128, 128)) > 0.5).astype(jnp.bfloat16)
    loss3 = dice_loss(inputs3, targets3, smooth=1.0)
    loss3 = jax.block_until_ready(loss3)
    ref3 = dice_loss_ref(inputs3, targets3, smooth=1.0)
    assert jnp.allclose(loss3, ref3, rtol=1e-4, atol=1e-4), (loss3, ref3)

    print("KERNEL_OK")
</pallas_src>

<mosaic_0001>
module attributes {stable_mosaic.version = 11 : i64} {
  func.func @_dice_partial_kernel(%arg0: i32, %arg1: i32, %arg2: memref<16x128xf32, #tpu.memory_space<vmem>>, %arg3: memref<16x128xf32, #tpu.memory_space<vmem>>, %arg4: memref<1x2x8x128xf32, #tpu.memory_space<vmem>>) attributes {dimension_semantics = [#tpu.dimension_semantics<arbitrary>, #tpu.dimension_semantics<arbitrary>], iteration_bounds = array<i64: 1, 1>, scalar_prefetch = 0 : i64, scratch_operands = 0 : i64, tpu.core_type = #tpu.core_type<tc>, window_params = [{transform_indices = @transform_0, window_bounds = array<i64: 16, 128>}, {transform_indices = @transform_1, window_bounds = array<i64: 16, 128>}, {transform_indices = @transform_2, window_bounds = array<i64: 1, 2, 8, 128>}]} {
    %c0_i32 = arith.constant 0 : i32
    %0 = arith.cmpi eq, %arg1, %c0_i32 : i32
    %1 = arith.extui %0 : i1 to i32
    %c0_i32_0 = arith.constant 0 : i32
    %2 = arith.cmpi ne, %1, %c0_i32_0 : i32
    scf.if %2 {
      %cst_21 = arith.constant 0.000000e+00 : f32
      %26 = vector.broadcast %cst_21 : f32 to vector<1x2x8x128xf32>
      %c0_22 = arith.constant 0 : index
      %c0_23 = arith.constant 0 : index
      %c0_24 = arith.constant 0 : index
      %c0_25 = arith.constant 0 : index
      %27 = vector.load %arg4[%c0_22, %c0_23, %c0_24, %c0_25] : memref<1x2x8x128xf32, #tpu.memory_space<vmem>>, vector<1x2x8x128xf32>
      tpu.vector_store %arg4[%c0_22, %c0_23, %c0_24, %c0_25], %26 {strides = array<i32>} : memref<1x2x8x128xf32, #tpu.memory_space<vmem>>, vector<1x2x8x128xf32>,
    } else {
    }
    %cst = arith.constant 0.000000e+00 : f32
    %3 = vector.broadcast %cst : f32 to vector<8x128xf32>
    %c0 = arith.constant 0 : index
    %c0_1 = arith.constant 0 : index
    %4 = vector.load %arg2[%c0, %c0_1] : memref<16x128xf32, #tpu.memory_space<vmem>>, vector<16x128xf32>
    %c0_2 = arith.constant 0 : index
    %c0_3 = arith.constant 0 : index
    %5 = vector.load %arg3[%c0_2, %c0_3] : memref<16x128xf32, #tpu.memory_space<vmem>>, vector<16x128xf32>
    %6 = vector.shape_cast %4 : vector<16x128xf32> to vector<2x8x128xf32>
    %7 = vector.shape_cast %5 : vector<16x128xf32> to vector<2x8x128xf32>
    %8 = arith.mulf %6, %7 : vector<2x8x128xf32>
    %cst_4 = arith.constant dense<0.000000e+00> : vector<8x128xf32>
    %9 = vector.multi_reduction <add>, %8, %cst_4 [0] : vector<2x8x128xf32> to vector<8x128xf32>
    %10 = arith.addf %6, %7 : vector<2x8x128xf32>
    %cst_5 = arith.constant dense<0.000000e+00> : vector<8x128xf32>
    %11 = vector.multi_reduction <add>, %10, %cst_5 [0] : vector<2x8x128xf32> to vector<8x128xf32>
    %12 = arith.addf %3, %9 : vector<8x128xf32>
    %13 = arith.addf %3, %11 : vector<8x128xf32>
    %c0_6 = arith.constant 0 : index
    %c0_7 = arith.constant 0 : index
    %c0_8 = arith.constant 0 : index
    %c0_9 = arith.constant 0 : index
    %14 = vector.load %arg4[%c0_6, %c0_7, %c0_8, %c0_9] : memref<1x2x8x128xf32, #tpu.memory_space<vmem>>, vector<1x1x8x128xf32>
    %15 = vector.shape_cast %14 : vector<1x1x8x128xf32> to vector<8x128xf32>
    %16 = arith.addf %15, %12 : vector<8x128xf32>
    %c0_10 = arith.constant 0 : index
    %c0_11 = arith.constant 0 : index
    %c0_12 = arith.constant 0 : index
    %c0_13 = arith.constant 0 : index
    %17 = vector.load %arg4[%c0_10, %c0_11, %c0_12, %c0_13] : memref<1x2x8x128xf32, #tpu.memory_space<vmem>>, vector<1x1x8x128xf32>
    %18 = vector.shape_cast %17 : vector<1x1x8x128xf32> to vector<8x128xf32>
    %19 = vector.shape_cast %16 : vector<8x128xf32> to vector<1x1x8x128xf32>
    tpu.vector_store %arg4[%c0_10, %c0_11, %c0_12, %c0_13], %19 {strides = array<i32>} : memref<1x2x8x128xf32, #tpu.memory_space<vmem>>, vector<1x1x8x128xf32>,
    %c0_14 = arith.constant 0 : index
    %c1 = arith.constant 1 : index
    %c0_15 = arith.constant 0 : index
    %c0_16 = arith.constant 0 : index
    %20 = vector.load %arg4[%c0_14, %c1, %c0_15, %c0_16] : memref<1x2x8x128xf32, #tpu.memory_space<vmem>>, vector<1x1x8x128xf32>
    %21 = vector.shape_cast %20 : vector<1x1x8x128xf32> to vector<8x128xf32>
    %22 = arith.addf %21, %13 : vector<8x128xf32>
    %c0_17 = arith.constant 0 : index
    %c1_18 = arith.constant 1 : index
    %c0_19 = arith.constant 0 : index
    %c0_20 = arith.constant 0 : index
    %23 = vector.load %arg4[%c0_17, %c1_18, %c0_19, %c0_20] : memref<1x2x8x128xf32, #tpu.memory_space<vmem>>, vector<1x1x8x128xf32>
    %24 = vector.shape_cast %23 : vector<1x1x8x128xf32> to vector<8x128xf32>
    %25 = vector.shape_cast %22 : vector<8x128xf32> to vector<1x1x8x128xf32>
    tpu.vector_store %arg4[%c0_17, %c1_18, %c0_19, %c0_20], %25 {strides = array<i32>} : memref<1x2x8x128xf32, #tpu.memory_space<vmem>>, vector<1x1x8x128xf32>,
    return
  }
  func.func @transform_0(%arg0: i32, %arg1: i32) -> (i32, i32) {
    %c1_i32 = arith.constant 1 : i32
    %0 = arith.muli %arg0, %c1_i32 : i32
    %1 = arith.addi %0, %arg1 : i32
    %c0_i32 = arith.constant 0 : i32
    %2 = arith.minsi %1, %c0_i32 : i32
    %c0_i32_0 = arith.constant 0 : i32
    %c0_i32_1 = arith.constant 0 : i32
    return %2, %c0_i32_0 : i32, i32
  }
  func.func @transform_1(%arg0: i32, %arg1: i32) -> (i32, i32) {
    %c1_i32 = arith.constant 1 : i32
    %0 = arith.muli %arg0, %c1_i32 : i32
    %1 = arith.addi %0, %arg1 : i32
    %c0_i32 = arith.constant 0 : i32
    %2 = arith.minsi %1, %c0_i32 : i32
    %c0_i32_0 = arith.constant 0 : i32
    %c0_i32_1 = arith.constant 0 : i32
    return %2, %c0_i32_0 : i32, i32
  }
  func.func @transform_2(%arg0: i32, %arg1: i32) -> (i32, i32, i32, i32) {
    %c0_i32 = arith.constant 0 : i32
    %c0_i32_0 = arith.constant 0 : i32
    %c0_i32_1 = arith.constant 0 : i32
    %c0_i32_2 = arith.constant 0 : i32
    return %arg0, %c0_i32, %c0_i32_0, %c0_i32_1 : i32, i32, i32, i32
  }
}

</mosaic_0001>

<llo_original>
// kernel: tpu_custom_call.1
$region0: #{tpu_custom_call.1}
  #allocation0 [shape = 'u32[]', space=smem, size = 0x4, offset = 0x4, fixed_abs, tag = 'smem constant byte address 0x4 - core index']
  #allocation1 [shape = 'u32[144,128]{1,0:T(1,128)}', space=vmem, size = 0x12000, scoped, tag = 'internal scratch']
  %s0 = inlined_call_operand.hbm [shape: f32[16,128], index: 0, kind: input, shape index: {}]
  %s1 = inlined_call_operand.hbm [shape: f32[16,128], index: 1, kind: input, shape index: {}]
  %s2 = inlined_call_operand.hbm [shape: f32[1,2,8,128], index: 2, kind: output, shape index: {}]
  %s3 = sld [smem:[#allocation0]]
  $region30: #{tpu_custom_call.1} parent=0
    _
  %s5 = ssub.s32 1, %s3
  %s6 = scalar_select 0, %s5, %s3
  $region1: #{tpu_custom_call.1} parent=0
    #allocation2 [shape = 'u8[8192]{0}', space=vmem, size = 0x2000, scoped, tag = 'input window, operand 0, single buffered']
    #allocation3 [shape = 's32[1]{0}', space=sflag, size = 0x4, scoped, tag = 'scoped memory for tpu_custom_call.1']
    #allocation4 [shape = 's32[1]{0}', space=sflag, size = 0x4, scoped, tag = 'scoped memory for tpu_custom_call.1']
    #allocation5 [shape = 'u8[8192]{0}', space=vmem, size = 0x2000, scoped, tag = 'input window, operand 1, single buffered']
    #allocation6 [shape = 's32[1]{0}', space=sflag, size = 0x4, scoped, tag = 'scoped memory for tpu_custom_call.1']
    #allocation7 [shape = 'u8[8192]{0}', space=vmem, size = 0x2000, scoped, tag = 'output window, operand 0, single buffered']
    %7 = vsyncpa [#allocation3], 0
    %8 = vsyncpa [#allocation6], 0
    %9 = vsyncpa [#allocation4], 0
    // Predicated region
    $region2: #{tpu_custom_call.1} parent=1 // pred_check
      _
    $region3: #{tpu_custom_call.1} parent=1 // pred_check_branch
      %11 = sbr.rel (0) target = $region5
    $region4: #{tpu_custom_call.1} parent=1 // pred_region
      %s12 = sadd.s32 0, 0
      %p13 = scmp.lt.s32.totalorder %s12, 0
      %s14 = scalar_select %p13, %s12, 0
      %s15 = smul.u32 2, %s14
      %s17 = ssub.s32 256, 256
      %18 = vsyncadd [#allocation3], %s17
      %s19 = smul.addr %s15, 128
      %s20 = scalar_lea.hbm %s0, %s19
      %s21 = sshll.u32 [#allocation2], 4
      %s22 = int_to_ptr.vmem [resolvable:$true] %s21
      %27 = dma.hbm_to_vmem [thread:$0]  %s20, 256, %s22, [#allocation3], 128, 128, 8
    $region5: #{tpu_custom_call.1} parent=1 // pred_fallthru
      _
    // Predicated region
    $region6: #{tpu_custom_call.1} parent=1 // pred_check
      _
    $region7: #{tpu_custom_call.1} parent=1 // pred_check_branch
      %29 = sbr.rel (0) target = $region9
    $region8: #{tpu_custom_call.1} parent=1 // pred_region
      %s30 = sadd.s32 0, 0
      %p31 = scmp.lt.s32.totalorder %s30, 0
      %s32 = scalar_select %p31, %s30, 0
      %s33 = smul.u32 2, %s32
      %s35 = ssub.s32 256, 256
      %36 = vsyncadd [#allocation6], %s35
      %s37 = smul.addr %s33, 128
      %s38 = scalar_lea.hbm %s1, %s37
      %s39 = sshll.u32 [#allocation5], 4
      %s40 = int_to_ptr.vmem [resolvable:$true] %s39
      %45 = dma.hbm_to_vmem [thread:$0]  %s38, 256, %s40, [#allocation6], 128, 128, 8
    $region9: #{tpu_custom_call.1} parent=1 // pred_fallthru
      _
    // Predicated region
    $region10: #{tpu_custom_call.1} parent=1 // pred_check
      _
    $region11: #{tpu_custom_call.1} parent=1 // pred_check_branch
      %47 = sbr.rel (0) target = $region13
    $region12: #{tpu_custom_call.1} parent=1 // pred_region
      %48 = dma.done [#allocation3], 256
    $region13: #{tpu_custom_call.1} parent=1 // pred_fallthru
      _
    // Predicated region
    $region14: #{tpu_custom_call.1} parent=1 // pred_check
      _
    $region15: #{tpu_custom_call.1} parent=1 // pred_check_branch
      %50 = sbr.rel (0) target = $region17
    $region16: #{tpu_custom_call.1} parent=1 // pred_region
      %51 = dma.done [#allocation6], 256
    $region17: #{tpu_custom_call.1} parent=1 // pred_fallthru
      _
    %s52 = sadd.s32 0, 0
    %p53 = scmp.lt.s32.totalorder %s52, 0
    %s54 = scalar_select %p53, %s52, 0
    %s55 = smul.u32 2, %s54
    %s56 = sadd.s32 0, 0
    %p57 = scmp.lt.s32.totalorder %s56, 0
    %s58 = scalar_select %p57, %s56, 0
    %s59 = smul.u32 2, %s58
    %p60 = scmp.eq.s32.totalorder 0, 0
    // Predicated region
    $region18: #{tpu_custom_call.1} parent=1 // pred_check
      %p61 = pneg %p60
    $region19: #{tpu_custom_call.1} parent=1 // pred_check_branch
      %63 = sbr.rel (%p61) target = $region21
    $region20: #{tpu_custom_call.1} parent=1 // pred_region
      %64 = vst [vmem:[#allocation7] sm:$0xff] 0.0
      %65 = vst [vmem:[#allocation7 + $0x8] sm:$0xff] 0.0
    $region21: #{tpu_custom_call.1} parent=1 // pred_fallthru
      _
    %v66 = vld [vmem:[#allocation2] sm:$0xff]
    %v67 = vld [vmem:[#allocation2 + $0x8] sm:$0xff]
    %v68 = vld [vmem:[#allocation5] sm:$0xff]
    %v69 = vld [vmem:[#allocation5 + $0x8] sm:$0xff]
    %v70 = vmul.f32 %v66, %v68
    %v71 = vmul.f32 %v67, %v69
    %v72 = vadd.f32 %v70, %v71
    %v73 = vadd.f32 %v66, %v68
    %v74 = vadd.f32 %v67, %v69
    %v75 = vadd.f32 %v73, %v74
    %v76 = vadd.f32 %v72, 0.0
    %v77 = vadd.f32 %v75, 0.0
    %v78 = vld [vmem:[#allocation7] sm:$0xff]
    %v79 = vadd.f32 %v78, %v76
    %80 = vst [vmem:[#allocation7] sm:$0xff] %v79
    %s81 = scalar_lea.vmem [#allocation7], 8
    %v82 = vld [vmem:[%s81] sm:$0xff]
    %v83 = vadd.f32 %v82, %v77
    %84 = vst [vmem:[%s81] sm:$0xff] %v83
    // Predicated region
    $region22: #{tpu_custom_call.1} parent=1 // pred_check
      _
    $region23: #{tpu_custom_call.1} parent=1 // pred_check_branch
      %86 = sbr.rel (0) target = $region25
    $region24: #{tpu_custom_call.1} parent=1 // pred_region
      %s88 = ssub.s32 256, 256
      %89 = vsyncadd [#allocation4], %s88
      %s90 = sshll.u32 [#allocation7], 4
      %s91 = int_to_ptr.vmem [resolvable:$true] %s90
      %96 = dma.vmem_to_hbm [thread:$0]  %s91, 256, %s2, [#allocation4], 128, 128, 8
    $region25: #{tpu_custom_call.1} parent=1 // pred_fallthru
      _
    // Predicated region
    $region26: #{tpu_custom_call.1} parent=1 // pred_check
      _
    $region27: #{tpu_custom_call.1} parent=1 // pred_check_branch
      %98 = sbr.rel (0) target = $region29
    $region28: #{tpu_custom_call.1} parent=1 // pred_region
      %99 = dma.done [#allocation4], 256
    $region29: #{tpu_custom_call.1} parent=1 // pred_fallthru
      _
    %100 = vsyncpa [#allocation3], 1
    %101 = vsyncpa [#allocation6], 1
    %102 = vsyncpa [#allocation4], 1

</llo_original>
